<compile_context>
chip_gen: v5e
topology: v5e:2x2
jax: 0.10.0
libtpu: 0.0.40
codegen_flags: <defaults>
</compile_context>

<pallas_src>
import functools
import math

import jax
import jax.numpy as jnp
from jax.experimental import pallas as pl
from jax.experimental.pallas import tpu as pltpu

NEG_INF = -1e9
LN_EPS = 1e-6  # PreSumm uses LayerNorm(eps=1e-6)


# ----------------------------- small helpers -----------------------------

def _pick_block(dim, candidates):
    """Largest candidate that evenly divides `dim`, else the full dim (valid BlockSpec)."""
    for c in candidates:
        if dim % c == 0:
            return c
    return dim


def _gelu(y):
    # tanh-approx gelu (PreSumm PositionwiseFeedForward activation)
    return 0.5 * y * (1.0 + jnp.tanh(0.7978845608028654 * (y + 0.044715 * y * y * y)))


# ----------------------------- Pallas kernels -----------------------------

def _ln_dense_kernel(x_ref, g_ref, b_ref, w_ref, bias_ref, o_ref, *, eps, activation):
    """out = act(LayerNorm(x) @ W + b).  LN in f32, matmul in bf16 with f32 accumulate."""
    x = x_ref[...]
    mean = jnp.mean(x, axis=-1, keepdims=True)
    var = jnp.mean((x - mean) ** 2, axis=-1, keepdims=True)
    xn = (x - mean) * jax.lax.rsqrt(var + eps)
    xn = xn * g_ref[...] + b_ref[...]
    y = jnp.dot(xn.astype(jnp.bfloat16), w_ref[...],
                preferred_element_type=jnp.float32) + bias_ref[...]
    if activation == "gelu":
        y = _gelu(y)
    o_ref[...] = y


def pallas_ln_dense(x2d, gamma, beta, w, bias, activation=None):
    """x2d: (M, K) f32.  Fused pre-LN + dense:  act(LN(x) @ w + bias) -> (M, N) f32."""
    M, K = x2d.shape
    N = w.shape[1]
    tm = _pick_block(M, (256, 128, 64, 32, 16, 8))
    tn = _pick_block(N, (512, 384, 256, 128))
    kernel = functools.partial(_ln_dense_kernel, eps=LN_EPS, activation=activation)
    return pl.pallas_call(
        kernel,
        out_shape=jax.ShapeDtypeStruct((M, N), jnp.float32),
        grid=(M // tm, N // tn),
        in_specs=[
            pl.BlockSpec((tm, K), lambda i, j: (i, 0)),
            pl.BlockSpec((1, K), lambda i, j: (0, 0)),
            pl.BlockSpec((1, K), lambda i, j: (0, 0)),
            pl.BlockSpec((K, tn), lambda i, j: (0, j)),
            pl.BlockSpec((1, tn), lambda i, j: (0, j)),
        ],
        out_specs=pl.BlockSpec((tm, tn), lambda i, j: (i, j)),
        compiler_params=pltpu.CompilerParams(
            dimension_semantics=("parallel", "parallel")),
    )(x2d, gamma.reshape(1, K), beta.reshape(1, K),
      w.astype(jnp.bfloat16), bias.reshape(1, N))


def _dense_kernel(x_ref, w_ref, bias_ref, *rest, activation, has_res):
    """Tiled matmul with K-axis accumulation; optional fused activation + residual add."""
    if has_res:
        res_ref, o_ref, acc_ref = rest
    else:
        o_ref, acc_ref = rest
    k = pl.program_id(2)

    @pl.when(k == 0)
    def _():
        acc_ref[...] = jnp.zeros_like(acc_ref)

    acc_ref[...] += jnp.dot(x_ref[...], w_ref[...], preferred_element_type=jnp.float32)

    @pl.when(k == pl.num_programs(2) - 1)
    def _():
        y = acc_ref[...] + bias_ref[...]
        if activation == "gelu":
            y = _gelu(y)
        if has_res:
            y = y + res_ref[...]
        o_ref[...] = y


def pallas_dense(x2d, w, bias, res=None, activation=None):
    """x2d: (M, K) @ w: (K, N) + bias (+ res): tiled over (M, N, K) with f32 accumulator."""
    M, K = x2d.shape
    N = w.shape[1]
    tm = _pick_block(M, (256, 128, 64, 32, 16, 8))
    tn = _pick_block(N, (512, 384, 256, 128))
    tk = _pick_block(K, (512, 256, 128))
    has_res = res is not None
    kernel = functools.partial(_dense_kernel, activation=activation, has_res=has_res)

    in_specs = [
        pl.BlockSpec((tm, tk), lambda i, j, k: (i, k)),
        pl.BlockSpec((tk, tn), lambda i, j, k: (k, j)),
        pl.BlockSpec((1, tn), lambda i, j, k: (0, j)),
    ]
    args = [x2d.astype(jnp.bfloat16), w.astype(jnp.bfloat16), bias.reshape(1, N)]
    if has_res:
        in_specs.append(pl.BlockSpec((tm, tn), lambda i, j, k: (i, j)))
        args.append(res)

    return pl.pallas_call(
        kernel,
        out_shape=jax.ShapeDtypeStruct((M, N), jnp.float32),
        grid=(M // tm, N // tn, K // tk),
        in_specs=in_specs,
        out_specs=pl.BlockSpec((tm, tn), lambda i, j, k: (i, j)),
        scratch_shapes=[pltpu.VMEM((tm, tn), jnp.float32)],
        compiler_params=pltpu.CompilerParams(
            dimension_semantics=("parallel", "parallel", "arbitrary")),
    )(*args)


def _layernorm_kernel(x_ref, g_ref, b_ref, o_ref, *, eps):
    x = x_ref[...]
    mean = jnp.mean(x, axis=-1, keepdims=True)
    var = jnp.mean((x - mean) ** 2, axis=-1, keepdims=True)
    o_ref[...] = (x - mean) * jax.lax.rsqrt(var + eps) * g_ref[...] + b_ref[...]


def pallas_layernorm(x2d, gamma, beta):
    """Row-tiled standalone LayerNorm (only used for the final encoder/decoder LN)."""
    M, D = x2d.shape
    tm = _pick_block(M, (512, 256, 128, 64, 32, 16, 8))
    kernel = functools.partial(_layernorm_kernel, eps=LN_EPS)
    return pl.pallas_call(
        kernel,
        out_shape=jax.ShapeDtypeStruct((M, D), jnp.float32),
        grid=(M // tm,),
        in_specs=[
            pl.BlockSpec((tm, D), lambda i: (i, 0)),
            pl.BlockSpec((1, D), lambda i: (0, 0)),
            pl.BlockSpec((1, D), lambda i: (0, 0)),
        ],
        out_specs=pl.BlockSpec((tm, D), lambda i: (i, 0)),
        compiler_params=pltpu.CompilerParams(dimension_semantics=("parallel",)),
    )(x2d, gamma.reshape(1, D), beta.reshape(1, D))


def _mha_core(q2, k2, v2, mask2, heads, dh, scale):
    """q2: (Lq, D), k2/v2: (Lk, D), mask2: (Mq, Lk) additive f32.  All heads in one pass."""
    qs = (q2 * scale).astype(jnp.bfloat16)       # fold 1/sqrt(dh) into q (Lq*D work, not Lq*Lk)
    kb = k2.astype(jnp.bfloat16)
    vb = v2.astype(jnp.bfloat16)
    outs = []
    for h in range(heads):                       # static unroll over heads (all heads per step)
        sl = slice(h * dh, (h + 1) * dh)
        s = jax.lax.dot_general(qs[:, sl], kb[:, sl],
                                (((1,), (1,)), ((), ())),
                                preferred_element_type=jnp.float32)    # (Lq, Lk)
        s = s + mask2
        s = s - jnp.max(s, axis=-1, keepdims=True)
        p = jnp.exp(s)
        p = p * pl.reciprocal(jnp.sum(p, axis=-1, keepdims=True), approx=True)
        outs.append(jnp.dot(p.astype(jnp.bfloat16), vb[:, sl],
                            preferred_element_type=jnp.float32))       # (Lq, dh)
    return jnp.concatenate(outs, axis=-1)        # (Lq, D) lane-dense store


def _self_attn_kernel(qkv_ref, m_ref, o_ref, *, heads, dh, scale):
    D = heads * dh
    qkv = qkv_ref[0]                             # (L, 3D)
    o_ref[0] = _mha_core(qkv[:, :D], qkv[:, D:2 * D], qkv[:, 2 * D:],
                         m_ref[0], heads, dh, scale)


def _cross_attn_kernel(q_ref, kv_ref, m_ref, o_ref, *, heads, dh, scale):
    D = heads * dh
    kv = kv_ref[0]                               # (Lk, 2D)
    o_ref[0] = _mha_core(q_ref[0], kv[:, :D], kv[:, D:], m_ref[0], heads, dh, scale)


# TODO(synk): for long sequences (Lk >~ 2k) switch the attention kernels to an
# online-softmax (flash) formulation tiled over Lk to stay within v7x's 64 MiB VMEM.

def pallas_self_attention(qkv, mask, heads):
    """qkv: (B, L, 3D) fused projections; mask: (B, Mq, L) additive f32 (Mq in {1, L})."""
    B, L, threeD = qkv.shape
    D = threeD // 3
    dh = D // heads
    Mq, Lk = mask.shape[1], mask.shape[2]
    kernel = functools.partial(_self_attn_kernel, heads=heads, dh=dh,
                               scale=1.0 / math.sqrt(dh))
    return pl.pallas_call(
        kernel,
        out_shape=jax.ShapeDtypeStruct((B, L, D), jnp.float32),
        grid=(B,),
        in_specs=[
            pl.BlockSpec((1, L, threeD), lambda b: (b, 0, 0)),
            pl.BlockSpec((1, Mq, Lk), lambda b: (b, 0, 0)),
        ],
        out_specs=pl.BlockSpec((1, L, D), lambda b: (b, 0, 0)),
        compiler_params=pltpu.CompilerParams(dimension_semantics=("parallel",)),
    )(qkv, mask)


def pallas_cross_attention(q, kv, mask, heads):
    """q: (B, Lq, D); kv: (B, Lk, 2D) fused key/value projections; mask: (B, 1, Lk)."""
    B, Lq, D = q.shape
    Lk = kv.shape[1]
    dh = D // heads
    Mq = mask.shape[1]
    kernel = functools.partial(_cross_attn_kernel, heads=heads, dh=dh,
                               scale=1.0 / math.sqrt(dh))
    return pl.pallas_call(
        kernel,
        out_shape=jax.ShapeDtypeStruct((B, Lq, D), jnp.float32),
        grid=(B,),
        in_specs=[
            pl.BlockSpec((1, Lq, D), lambda b: (b, 0, 0)),
            pl.BlockSpec((1, Lk, 2 * D), lambda b: (b, 0, 0)),
            pl.BlockSpec((1, Mq, Lk), lambda b: (b, 0, 0)),
        ],
        out_specs=pl.BlockSpec((1, Lq, D), lambda b: (b, 0, 0)),
        compiler_params=pltpu.CompilerParams(dimension_semantics=("parallel",)),
    )(q, kv, mask)


# ----------------------------- model glue (plain JAX orchestration) -----------------------------

def positional_encoding(max_pos, D):
    pos = jnp.arange(max_pos, dtype=jnp.float32)[:, None]
    div = jnp.exp(jnp.arange(0, D, 2, dtype=jnp.float32) * -(math.log(10000.0) / D))
    pe = jnp.zeros((max_pos, D), dtype=jnp.float32)
    pe = pe.at[:, 0::2].set(jnp.sin(pos * div))
    pe = pe.at[:, 1::2].set(jnp.cos(pos * div))
    return pe


def encoder_forward(p, src, mask_src, heads, pe):
    B, L = src.shape
    D = p["emb"].shape[1]
    x = jnp.take(p["emb"], src, axis=0) * math.sqrt(D) + pe[:L]
    # additive key-padding mask, one per batch element (shared across heads/queries): (B, 1, L)
    enc_mask = jnp.where(mask_src, 0.0, NEG_INF).astype(jnp.float32)[:, None, :]
    x2d = x.reshape(B * L, D)
    # NOTE: pre-LN is applied uniformly to every layer (same convention as the original port).
    for lp in p["layers"]:
        qkv = pallas_ln_dense(x2d, lp["ln_g"], lp["ln_b"], lp["wqkv"], lp["bqkv"])
        ctx = pallas_self_attention(qkv.reshape(B, L, 3 * D), enc_mask, heads)
        x2d = pallas_dense(ctx.reshape(B * L, D), lp["wo"], lp["bo"], res=x2d)
        inter = pallas_ln_dense(x2d, lp["ff"]["ln_g"], lp["ff"]["ln_b"],
                                lp["ff"]["w1"], lp["ff"]["b1"], activation="gelu")
        x2d = pallas_dense(inter, lp["ff"]["w2"], lp["ff"]["b2"], res=x2d)
    x2d = pallas_layernorm(x2d, p["final_ln_g"], p["final_ln_b"])
    return x2d.reshape(B, L, D)


def decoder_forward(p, tgt_in, memory, mask_src, heads, pe):
    B, Lt = tgt_in.shape
    Ls = memory.shape[1]
    D = p["emb"].shape[1]
    x = jnp.take(p["emb"], tgt_in, axis=0) * math.sqrt(D) + pe[:Lt]

    tgt_pad = (tgt_in == 0)                                    # (B, Lt) key padding
    causal = jnp.triu(jnp.ones((Lt, Lt), dtype=bool), k=1)     # True = future (masked)
    dec_mask = tgt_pad[:, None, :] | causal[None]              # (B, Lt, Lt)
    self_mask = jnp.where(dec_mask, NEG_INF, 0.0).astype(jnp.float32)            # (B, Lt, Lt)
    src_mask = jnp.where(mask_src, 0.0, NEG_INF).astype(jnp.float32)[:, None, :]  # (B, 1, Ls)

    x2d = x.reshape(B * Lt, D)
    mem2d = memory.reshape(B * Ls, D)
    for lp in p["layers"]:
        # masked self-attention (pre-LN fused into the QKV projection)
        qkv = pallas_ln_dense(x2d, lp["ln1_g"], lp["ln1_b"], lp["wqkv_self"], lp["bqkv_self"])
        sctx = pallas_self_attention(qkv.reshape(B, Lt, 3 * D), self_mask, heads)
        x2d = pallas_dense(sctx.reshape(B * Lt, D), lp["wo_self"], lp["bo_self"], res=x2d)
        # cross-attention: query = LN(x) @ Wq ; key/value = memory @ [Wk|Wv] (fused, no LN)
        q = pallas_ln_dense(x2d, lp["ln2_g"], lp["ln2_b"], lp["wq_ctx"], lp["bq_ctx"])
        kv = pallas_dense(mem2d, lp["wkv_ctx"], lp["bkv_ctx"])
        cctx = pallas_cross_attention(q.reshape(B, Lt, D), kv.reshape(B, Ls, 2 * D),
                                      src_mask, heads)
        x2d = pallas_dense(cctx.reshape(B * Lt, D), lp["wo_ctx"], lp["bo_ctx"], res=x2d)
        # position-wise feed forward: w2(gelu(w1(LN(x)))) + x
        inter = pallas_ln_dense(x2d, lp["ff"]["ln_g"], lp["ff"]["ln_b"],
                                lp["ff"]["w1"], lp["ff"]["b1"], activation="gelu")
        x2d = pallas_dense(inter, lp["ff"]["w2"], lp["ff"]["b2"], res=x2d)
    x2d = pallas_layernorm(x2d, p["final_ln_g"], p["final_ln_b"])
    return x2d.reshape(B, Lt, D)


def pretrain_model_forward(params, src, tgt, segs, mask_src, mask_tgt, heads, pe):
    # segs / mask_tgt are accepted for signature parity; this custom transformer encoder
    # only consumes (src, mask_src), and the decoder derives its own padding from tgt tokens.
    top_vec = encoder_forward(params["encoder"], src, mask_src, heads, pe)
    dec_out = decoder_forward(params["decoder"], tgt[:, :-1], top_vec, mask_src, heads, pe)
    return dec_out, None


# ----------------------------- deterministic parameter init -----------------------------

def init_params(key, enc_vocab, dec_vocab, D, FF, enc_layers, dec_layers):
    keys = iter(jax.random.split(key, 4096))

    def nrm(shape):  # matches module.weight.data.normal_(0.0, 0.02)
        return 0.02 * jax.random.normal(next(keys), shape, dtype=jnp.float32)

    def ff_params():
        return {"ln_g": jnp.ones((D,), jnp.float32), "ln_b": jnp.zeros((D,), jnp.float32),
                "w1": nrm((D, FF)), "b1": jnp.zeros((FF,), jnp.float32),
                "w2": nrm((FF, D)), "b2": jnp.zeros((D,), jnp.float32)}

    def enc_layer_params():
        return {"ln_g": jnp.ones((D,), jnp.float32), "ln_b": jnp.zeros((D,), jnp.float32),
                "wqkv": nrm((D, 3 * D)), "bqkv": jnp.zeros((3 * D,), jnp.float32),
                "wo": nrm((D, D)), "bo": jnp.zeros((D,), jnp.float32),
                "ff": ff_params()}

    def dec_layer_params():
        return {"ln1_g": jnp.ones((D,), jnp.float32), "ln1_b": jnp.zeros((D,), jnp.float32),
                "wqkv_self": nrm((D, 3 * D)), "bqkv_self": jnp.zeros((3 * D,), jnp.float32),
                "wo_self": nrm((D, D)), "bo_self": jnp.zeros((D,), jnp.float32),
                "ln2_g": jnp.ones((D,), jnp.float32), "ln2_b": jnp.zeros((D,), jnp.float32),
                "wq_ctx": nrm((D, D)), "bq_ctx": jnp.zeros((D,), jnp.float32),
                "wkv_ctx": nrm((D, 2 * D)), "bkv_ctx": jnp.zeros((2 * D,), jnp.float32),
                "wo_ctx": nrm((D, D)), "bo_ctx": jnp.zeros((D,), jnp.float32),
                "ff": ff_params()}

    enc_emb = nrm((enc_vocab, D)).at[0].set(0.0)   # padding_idx=0
    dec_emb = nrm((dec_vocab, D)).at[0].set(0.0)   # padding_idx=0 (also tied to generator[0])

    encoder = {"emb": enc_emb,
               "layers": [enc_layer_params() for _ in range(enc_layers)],
               "final_ln_g": jnp.ones((D,), jnp.float32),
               "final_ln_b": jnp.zeros((D,), jnp.float32)}
    decoder = {"emb": dec_emb,
               "layers": [dec_layer_params() for _ in range(dec_layers)],
               "final_ln_g": jnp.ones((D,), jnp.float32),
               "final_ln_b": jnp.zeros((D,), jnp.float32)}
    return {"encoder": encoder, "decoder": decoder}


# ----------------------------- main -----------------------------

if __name__ == "__main__":
    # small but lane-dense config consistent with the module's args
    B, Ls, Lt = 2, 16, 16
    D, heads, FF = 128, 4, 256
    enc_layers = dec_layers = 2
    enc_vocab = dec_vocab = 64
    max_pos = 64

    key = jax.random.PRNGKey(0)
    kp, ks, kt = jax.random.split(key, 3)
    params = init_params(kp, enc_vocab, dec_vocab, D, FF, enc_layers, dec_layers)
    pe = positional_encoding(max_pos, D)

    src = jax.random.randint(ks, (B, Ls), 1, enc_vocab, dtype=jnp.int32)
    tgt = jax.random.randint(kt, (B, Lt), 1, dec_vocab, dtype=jnp.int32)
    src = src.at[1, 12:].set(0)   # pad tail of second example
    tgt = tgt.at[1, 12:].set(0)
    mask_src = (src != 0)
    mask_tgt = (tgt != 0)
    segs = jnp.zeros((B, Ls), dtype=jnp.int32)  # unused by this encoder variant

    # TODO(synk): dropout layers are identity (eval-mode) and the tied generator/LogSoftmax
    # is not part of forward(), so neither is emitted as kernel work.
    dec_out, none_out = pretrain_model_forward(params, src, tgt, segs, mask_src, mask_tgt,
                                               heads, pe)
    jax.block_until_ready(dec_out)
    assert dec_out.shape == (B, Lt - 1, D)
    assert none_out is None
    assert bool(jnp.all(jnp.isfinite(dec_out)))
    print("KERNEL_OK")
</pallas_src>

<mosaic_0001>
module attributes {stable_mosaic.version = 11 : i64} {
  func.func @_ln_dense_kernel(%arg0: i32, %arg1: i32, %arg2: memref<32x128xf32, #tpu.memory_space<vmem>>, %arg3: memref<1x128xf32, #tpu.memory_space<vmem>>, %arg4: memref<1x128xf32, #tpu.memory_space<vmem>>, %arg5: memref<128x384xbf16, #tpu.memory_space<vmem>>, %arg6: memref<1x384xf32, #tpu.memory_space<vmem>>, %arg7: memref<32x384xf32, #tpu.memory_space<vmem>>) attributes {dimension_semantics = [#tpu.dimension_semantics<parallel>, #tpu.dimension_semantics<parallel>], iteration_bounds = array<i64: 1, 1>, scalar_prefetch = 0 : i64, scratch_operands = 0 : i64, tpu.core_type = #tpu.core_type<tc>, window_params = [{transform_indices = @transform_0, window_bounds = array<i64: 32, 128>}, {pipeline_mode = #tpu.pipeline_mode<synchronous>, transform_indices = @transform_1, window_bounds = array<i64: 1, 128>}, {pipeline_mode = #tpu.pipeline_mode<synchronous>, transform_indices = @transform_2, window_bounds = array<i64: 1, 128>}, {transform_indices = @transform_3, window_bounds = array<i64: 128, 384>}, {transform_indices = @transform_4, window_bounds = array<i64: 1, 384>}, {transform_indices = @transform_5, window_bounds = array<i64: 32, 384>}]} {
    %c0 = arith.constant 0 : index
    %c0_0 = arith.constant 0 : index
    %0 = vector.load %arg2[%c0, %c0_0] : memref<32x128xf32, #tpu.memory_space<vmem>>, vector<32x128xf32>
    %cst = arith.constant dense<0.000000e+00> : vector<32xf32>
    %1 = vector.multi_reduction <add>, %0, %cst [1] : vector<32x128xf32> to vector<32xf32>
    %2 = vector.shape_cast %1 : vector<32xf32> to vector<32x1xf32>
    %cst_1 = arith.constant 1.280000e+02 : f32
    %3 = vector.broadcast %cst_1 : f32 to vector<32x1xf32>
    %4 = arith.divf %2, %3 : vector<32x1xf32>
    %5 = vector.broadcast %4 : vector<32x1xf32> to vector<32x128xf32>
    %6 = arith.subf %0, %5 : vector<32x128xf32>
    %7 = arith.mulf %6, %6 : vector<32x128xf32>
    %cst_2 = arith.constant dense<0.000000e+00> : vector<32xf32>
    %8 = vector.multi_reduction <add>, %7, %cst_2 [1] : vector<32x128xf32> to vector<32xf32>
    %9 = vector.shape_cast %8 : vector<32xf32> to vector<32x1xf32>
    %cst_3 = arith.constant 1.280000e+02 : f32
    %10 = vector.broadcast %cst_3 : f32 to vector<32x1xf32>
    %11 = arith.divf %9, %10 : vector<32x1xf32>
    %12 = vector.broadcast %4 : vector<32x1xf32> to vector<32x128xf32>
    %13 = arith.subf %0, %12 : vector<32x128xf32>
    %cst_4 = arith.constant 9.99999997E-7 : f32
    %14 = vector.broadcast %cst_4 : f32 to vector<32x1xf32>
    %15 = arith.addf %11, %14 : vector<32x1xf32>
    %16 = math.rsqrt %15 : vector<32x1xf32>
    %17 = vector.broadcast %16 : vector<32x1xf32> to vector<32x128xf32>
    %18 = arith.mulf %13, %17 : vector<32x128xf32>
    %c0_5 = arith.constant 0 : index
    %c0_6 = arith.constant 0 : index
    %19 = vector.load %arg3[%c0_5, %c0_6] : memref<1x128xf32, #tpu.memory_space<vmem>>, vector<1x128xf32>
    %20 = vector.broadcast %19 : vector<1x128xf32> to vector<32x128xf32>
    %21 = arith.mulf %18, %20 : vector<32x128xf32>
    %c0_7 = arith.constant 0 : index
    %c0_8 = arith.constant 0 : index
    %22 = vector.load %arg4[%c0_7, %c0_8] : memref<1x128xf32, #tpu.memory_space<vmem>>, vector<1x128xf32>
    %23 = vector.broadcast %22 : vector<1x128xf32> to vector<32x128xf32>
    %24 = arith.addf %21, %23 : vector<32x128xf32>
    %25 = arith.truncf %24 : vector<32x128xf32> to vector<32x128xbf16>
    %c0_9 = arith.constant 0 : index
    %c0_10 = arith.constant 0 : index
    %26 = vector.load %arg5[%c0_9, %c0_10] : memref<128x384xbf16, #tpu.memory_space<vmem>>, vector<128x384xbf16>
    %cst_11 = arith.constant dense<0.000000e+00> : vector<32x384xf32>
    %27 = tpu.matmul %25, %26, %cst_11 {dimension_numbers = #tpu.dot_dimension_numbers<[1], [0], [0], [1], [0, 0, 1, 1], [], []>} : vector<32x128xbf16>, vector<128x384xbf16>, vector<32x384xf32> -> vector<32x384xf32>
    %c0_12 = arith.constant 0 : index
    %c0_13 = arith.constant 0 : index
    %28 = vector.load %arg6[%c0_12, %c0_13] : memref<1x384xf32, #tpu.memory_space<vmem>>, vector<1x384xf32>
    %29 = vector.broadcast %28 : vector<1x384xf32> to vector<32x384xf32>
    %30 = arith.addf %27, %29 : vector<32x384xf32>
    %c0_14 = arith.constant 0 : index
    %c0_15 = arith.constant 0 : index
    %31 = vector.load %arg7[%c0_14, %c0_15] : memref<32x384xf32, #tpu.memory_space<vmem>>, vector<32x384xf32>
    tpu.vector_store %arg7[%c0_14, %c0_15], %30 {strides = array<i32>} : memref<32x384xf32, #tpu.memory_space<vmem>>, vector<32x384xf32>,
    return
  }
  func.func @transform_0(%arg0: i32, %arg1: i32) -> (i32, i32) {
    %c0_i32 = arith.constant 0 : i32
    %c0_i32_0 = arith.constant 0 : i32
    return %arg0, %c0_i32 : i32, i32
  }
  func.func @transform_1(%arg0: i32, %arg1: i32) -> (i32, i32) {
    %c0_i32 = arith.constant 0 : i32
    %c0_i32_0 = arith.constant 0 : i32
    %c0_i32_1 = arith.constant 0 : i32
    return %c0_i32, %c0_i32_0 : i32, i32
  }
  func.func @transform_2(%arg0: i32, %arg1: i32) -> (i32, i32) {
    %c0_i32 = arith.constant 0 : i32
    %c0_i32_0 = arith.constant 0 : i32
    %c0_i32_1 = arith.constant 0 : i32
    return %c0_i32, %c0_i32_0 : i32, i32
  }
  func.func @transform_3(%arg0: i32, %arg1: i32) -> (i32, i32) {
    %c0_i32 = arith.constant 0 : i32
    %c0_i32_0 = arith.constant 0 : i32
    return %c0_i32, %arg1 : i32, i32
  }
  func.func @transform_4(%arg0: i32, %arg1: i32) -> (i32, i32) {
    %c0_i32 = arith.constant 0 : i32
    %c0_i32_0 = arith.constant 0 : i32
    return %c0_i32, %arg1 : i32, i32
  }
  func.func @transform_5(%arg0: i32, %arg1: i32) -> (i32, i32) {
    %c0_i32 = arith.constant 0 : i32
    return %arg0, %arg1 : i32, i32
  }
}

</mosaic_0001>

<llo_original>
// kernel: tpu_custom_call.1
$region0: #{tpu_custom_call.1}
  #allocation0 [shape = 'u32[]', space=smem, size = 0x4, offset = 0x4, fixed_abs, tag = 'smem constant byte address 0x4 - core index']
  #allocation1 [shape = 'u32[72,128]{1,0:T(1,128)}', space=vmem, size = 0x9000, scoped, tag = 'internal scratch']
  %s0 = inlined_call_operand.hbm [shape: f32[32,128], index: 0, kind: input, shape index: {}]
  %s1 = inlined_call_operand.hbm [shape: f32[1,128], index: 1, kind: input, shape index: {}]
  %s2 = inlined_call_operand.hbm [shape: f32[1,128], index: 2, kind: input, shape index: {}]
  %s3 = inlined_call_operand.hbm [shape: bf16[128,384], index: 3, kind: input, shape index: {}]
  %s4 = inlined_call_operand.vmem [shape: f32[1,384], index: 4, kind: input, shape index: {}]
  %s5 = inlined_call_operand.hbm [shape: f32[32,384], index: 5, kind: output, shape index: {}]
  %s6 = sld [smem:[#allocation0]]
  $region46: #{tpu_custom_call.1} parent=0
    _
  %s8 = ssub.s32 1, %s6
  %s9 = scalar_select 0, %s8, %s6
  $region1: #{tpu_custom_call.1} parent=0
    #allocation2 [shape = 'u8[16384]{0}', space=vmem, size = 0x4000, scoped, tag = 'input window, operand 0, single buffered']
    #allocation3 [shape = 's32[1]{0}', space=sflag, size = 0x4, scoped, tag = 'scoped memory for tpu_custom_call.1']
    #allocation4 [shape = 's32[1]{0}', space=sflag, size = 0x4, scoped, tag = 'scoped memory for tpu_custom_call.1']
    #allocation5 [shape = 'u8[512]{0}', space=vmem, size = 0x400, scoped, tag = 'input window, operand 1, single buffered']
    #allocation6 [shape = 's32[1]{0}', space=sflag, size = 0x4, scoped, tag = 'scoped memory for tpu_custom_call.1']
    #allocation7 [shape = 'u8[512]{0}', space=vmem, size = 0x400, scoped, tag = 'input window, operand 2, single buffered']
    #allocation8 [shape = 'u8[98304]{0}', space=vmem, size = 0x18000, scoped, tag = 'input window, operand 3, single buffered']
    #allocation9 [shape = 's32[1]{0}', space=sflag, size = 0x4, scoped, tag = 'scoped memory for tpu_custom_call.1']
    #allocation10 [shape = 'u8[49152]{0}', space=vmem, size = 0xc000, scoped, tag = 'output window, operand 0, single buffered']
    %10 = vsyncpa [#allocation3], 0
    %11 = vsyncpa [#allocation6], 0
    %12 = vsyncpa [#allocation9], 0
    %13 = vsyncpa [#allocation4], 0
    // Predicated region
    $region2: #{tpu_custom_call.1} parent=1 // pred_check
      _
    $region3: #{tpu_custom_call.1} parent=1 // pred_check_branch
      %15 = sbr.rel (0) target = $region5
    $region4: #{tpu_custom_call.1} parent=1 // pred_region
      %17 = vsyncadd [#allocation3], 0
      %s18 = sshll.u32 %s0, 4
      %s19 = int_to_ptr.hbm [resolvable:$true] %s18
      %s20 = sshll.u32 [#allocation2], 4
      %s21 = int_to_ptr.vmem [resolvable:$true] %s20
      %26 = dma.hbm_to_vmem [thread:$0]  %s19, 512, %s21, [#allocation3], 128, 128, 8
    $region5: #{tpu_custom_call.1} parent=1 // pred_fallthru
      _
    // Predicated region
    $region6: #{tpu_custom_call.1} parent=1 // pred_check
      _
    $region7: #{tpu_custom_call.1} parent=1 // pred_check_branch
      %28 = sbr.rel (0) target = $region9
    $region8: #{tpu_custom_call.1} parent=1 // pred_region
      %30 = vsyncadd [#allocation6], 0
      %s32 = sshll.u32 %s1, 4
      %s33 = int_to_ptr.hbm [resolvable:$true] %s32
      %s34 = sshll.u32 [#allocation5], 4
      %s35 = int_to_ptr.vmem [resolvable:$true] %s34
      %37 = dma.hbm_to_vmem [thread:$0]  %s33, 16, %s35, [#allocation6]
    $region9: #{tpu_custom_call.1} parent=1 // pred_fallthru
      _
    // Predicated region
    $region10: #{tpu_custom_call.1} parent=1 // pred_check
      _
    $region11: #{tpu_custom_call.1} parent=1 // pred_check_branch
      %39 = sbr.rel (0) target = $region13
    $region12: #{tpu_custom_call.1} parent=1 // pred_region
      %41 = vsyncadd [#allocation6], 0
      %s43 = sshll.u32 %s2, 4
      %s44 = int_to_ptr.hbm [resolvable:$true] %s43
      %s45 = sshll.u32 [#allocation7], 4
      %s46 = int_to_ptr.vmem [resolvable:$true] %s45
      %48 = dma.hbm_to_vmem [thread:$0]  %s44, 16, %s46, [#allocation6]
    $region13: #{tpu_custom_call.1} parent=1 // pred_fallthru
      _
    // Predicated region
    $region14: #{tpu_custom_call.1} parent=1 // pred_check
      _
    $region15: #{tpu_custom_call.1} parent=1 // pred_check_branch
      %50 = sbr.rel (0) target = $region17
    $region16: #{tpu_custom_call.1} parent=1 // pred_region
      %52 = vsyncadd [#allocation9], 0
      %s53 = sshll.u32 %s3, 4
      %s54 = int_to_ptr.hbm [resolvable:$true] %s53
      %s55 = sshll.u32 [#allocation8], 4
      %s56 = int_to_ptr.vmem [resolvable:$true] %s55
      %61 = dma.hbm_to_vmem [thread:$0]  %s54, 3072, %s56, [#allocation9], 192, 192, 12
    $region17: #{tpu_custom_call.1} parent=1 // pred_fallthru
      _
    // Predicated region
    $region18: #{tpu_custom_call.1} parent=1 // pred_check
      _
    $region19: #{tpu_custom_call.1} parent=1 // pred_check_branch
      %63 = sbr.rel (0) target = $region21
    $region20: #{tpu_custom_call.1} parent=1 // pred_region
      _
    $region21: #{tpu_custom_call.1} parent=1 // pred_fallthru
      _
    // Predicated region
    $region22: #{tpu_custom_call.1} parent=1 // pred_check
      _
    $region23: #{tpu_custom_call.1} parent=1 // pred_check_branch
      %65 = sbr.rel (0) target = $region25
    $region24: #{tpu_custom_call.1} parent=1 // pred_region
      %67 = dma.done [#allocation3], 512
    $region25: #{tpu_custom_call.1} parent=1 // pred_fallthru
      _
    // Predicated region
    $region26: #{tpu_custom_call.1} parent=1 // pred_check
      _
    $region27: #{tpu_custom_call.1} parent=1 // pred_check_branch
      %69 = sbr.rel (0) target = $region29
    $region28: #{tpu_custom_call.1} parent=1 // pred_region
      %71 = dma.done [#allocation6], 16
    $region29: #{tpu_custom_call.1} parent=1 // pred_fallthru
      _
    // Predicated region
    $region30: #{tpu_custom_call.1} parent=1 // pred_check
      _
    $region31: #{tpu_custom_call.1} parent=1 // pred_check_branch
      %73 = sbr.rel (0) target = $region33
    $region32: #{tpu_custom_call.1} parent=1 // pred_region
      %75 = dma.done [#allocation6], 16
    $region33: #{tpu_custom_call.1} parent=1 // pred_fallthru
      _
    // Predicated region
    $region34: #{tpu_custom_call.1} parent=1 // pred_check
      _
    $region35: #{tpu_custom_call.1} parent=1 // pred_check_branch
      %77 = sbr.rel (0) target = $region37
    $region36: #{tpu_custom_call.1} parent=1 // pred_region
      %79 = dma.done [#allocation9], 3072
    $region37: #{tpu_custom_call.1} parent=1 // pred_fallthru
      _
    %v80 = vld [vmem:[#allocation2] sm:$0xff]
    %v81 = vld [vmem:[#allocation2 + $0x8] sm:$0xff]
    %v82 = vld [vmem:[#allocation2 + $0x10] sm:$0xff]
    %v83 = vld [vmem:[#allocation2 + $0x18] sm:$0xff]
    %84 = vadd.xlane.f32.xlu0 %v80
    %v85 = vpop.xlane.xlu0 %84
    %86 = vadd.xlane.f32.xlu0 %v81
    %v87 = vpop.xlane.xlu0 %86
    %88 = vadd.xlane.f32.xlu0 %v82
    %v89 = vpop.xlane.xlu0 %88
    %90 = vadd.xlane.f32.xlu0 %v83
    %v91 = vpop.xlane.xlu0 %90
    %v92 = vrcp.pop 128.0
    %v93 = vmul.f32 128.0, %v92
    %v94 = vsub.f32 1.0, %v93
    %v95 = vmul.f32 %v92, %v94
    %v96 = vadd.f32 %v92, %v95
    %vm97 = vweird.f32 %v92
    %v98 = vsel %vm97, %v92, %v96
    %v99 = vmul.f32 %v85, %v98
    %v100 = vmul.f32 %v87, %v98
    %v101 = vmul.f32 %v89, %v98
    %v102 = vmul.f32 %v91, %v98
    %v103 = vsub.f32 %v80, %v99
    %v104 = vsub.f32 %v81, %v100
    %v105 = vsub.f32 %v82, %v101
    %v106 = vsub.f32 %v83, %v102
    %v107 = vmul.f32 %v103, %v103
    %v108 = vmul.f32 %v104, %v104
    %v109 = vmul.f32 %v105, %v105
    %v110 = vmul.f32 %v106, %v106
    %111 = vadd.xlane.f32.xlu0 %v107
    %v112 = vpop.xlane.xlu0 %111
    %113 = vadd.xlane.f32.xlu0 %v108
    %v114 = vpop.xlane.xlu0 %113
    %115 = vadd.xlane.f32.xlu0 %v109
    %v116 = vpop.xlane.xlu0 %115
    %117 = vadd.xlane.f32.xlu0 %v110
    %v118 = vpop.xlane.xlu0 %117
    %v119 = vmul.f32 %v112, %v98
    %v120 = vmul.f32 %v114, %v98
    %v121 = vmul.f32 %v116, %v98
    %v122 = vmul.f32 %v118, %v98
    %v123 = vadd.f32 %v119, 1e-06
    %v124 = vadd.f32 %v120, 1e-06
    %v125 = vadd.f32 %v121, 1e-06
    %v126 = vadd.f32 %v122, 1e-06
    %v127 = vrsqrt.pop %v123
    %v128 = vmul.f32 %v127, %v123
    %v129 = vmul.f32 %v128, %v127
    %v130 = vmul.f32 0.5, %v129
    %v131 = vsub.f32 1.5, %v130
    %v132 = vmul.f32 %v127, %v131
    %vm133 = vweird.f32 %v123
    %vm134 = vweird.f32 %v127
    %vm135 = vmor %vm133, %vm134
    %v136 = vsel %vm135, %v127, %v132
    %v137 = vrsqrt.pop %v124
    %v138 = vmul.f32 %v137, %v124
    %v139 = vmul.f32 %v138, %v137
    %v140 = vmul.f32 0.5, %v139
    %v141 = vsub.f32 1.5, %v140
    %v142 = vmul.f32 %v137, %v141
    %vm143 = vweird.f32 %v124
    %vm144 = vweird.f32 %v137
    %vm145 = vmor %vm143, %vm144
    %v146 = vsel %vm145, %v137, %v142
    %v147 = vrsqrt.pop %v125
    %v148 = vmul.f32 %v147, %v125
    %v149 = vmul.f32 %v148, %v147
    %v150 = vmul.f32 0.5, %v149
    %v151 = vsub.f32 1.5, %v150
    %v152 = vmul.f32 %v147, %v151
    %vm153 = vweird.f32 %v125
    %vm154 = vweird.f32 %v147
    %vm155 = vmor %vm153, %vm154
    %v156 = vsel %vm155, %v147, %v152
    %v157 = vrsqrt.pop %v126
    %v158 = vmul.f32 %v157, %v126
    %v159 = vmul.f32 %v158, %v157
    %v160 = vmul.f32 0.5, %v159
    %v161 = vsub.f32 1.5, %v160
    %v162 = vmul.f32 %v157, %v161
    %vm163 = vweird.f32 %v126
    %vm164 = vweird.f32 %v157
    %vm165 = vmor %vm163, %vm164
    %v166 = vsel %vm165, %v157, %v162
    %v167 = vmul.f32 %v103, %v136
    %v168 = vmul.f32 %v104, %v146
    %v169 = vmul.f32 %v105, %v156
    %v170 = vmul.f32 %v106, %v166
    %v171 = vld [vmem:[#allocation5] sm:$0x1]
    %v173 = vperm.slane %v171, 0
    %v175 = vmul.f32 %v167, %v173
    %v176 = vmul.f32 %v168, %v173
    %v177 = vmul.f32 %v169, %v173
    %v178 = vmul.f32 %v170, %v173
    %v179 = vld [vmem:[#allocation7] sm:$0x1]
    %v181 = vperm.slane %v179, 0
    %v183 = vadd.f32 %v175, %v181
    %v184 = vadd.f32 %v176, %v181
    %v185 = vadd.f32 %v177, %v181
    %v186 = vadd.f32 %v178, %v181
    %v187 = vpack.c.bf16 %v184, %v183
    %v188 = vpack.c.bf16 %v186, %v185
    %v189 = vld [vmem:[#allocation8] sm:$0xff]
    %v190 = vld [vmem:[#allocation8 + $0x8] sm:$0xf]
    %v191 = vld [vmem:[#allocation8 + $0xc] sm:$0xff]
    %v192 = vld [vmem:[#allocation8 + $0x14] sm:$0xf]
    %v193 = vld [vmem:[#allocation8 + $0x18] sm:$0xff]
    %v194 = vld [vmem:[#allocation8 + $0x20] sm:$0xf]
    %v195 = vld [vmem:[#allocation8 + $0x24] sm:$0xff]
    %v196 = vld [vmem:[#allocation8 + $0x2c] sm:$0xf]
    %v197 = vld [vmem:[#allocation8 + $0x30] sm:$0xff]
    %v198 = vld [vmem:[#allocation8 + $0x38] sm:$0xf]
    %v199 = vld [vmem:[#allocation8 + $0x3c] sm:$0xff]
    %v200 = vld [vmem:[#allocation8 + $0x44] sm:$0xf]
    %v201 = vld [vmem:[#allocation8 + $0x48] sm:$0xff]
    %v202 = vld [vmem:[#allocation8 + $0x50] sm:$0xf]
    %v203 = vld [vmem:[#allocation8 + $0x54] sm:$0xff]
    %v204 = vld [vmem:[#allocation8 + $0x5c] sm:$0xf]
    %v205 = vld [vmem:[#allocation8 + $0x60] sm:$0xff]
    %v206 = vld [vmem:[#allocation8 + $0x68] sm:$0xf]
    %v207 = vld [vmem:[#allocation8 + $0x6c] sm:$0xff]
    %v208 = vld [vmem:[#allocation8 + $0x74] sm:$0xf]
    %v209 = vld [vmem:[#allocation8 + $0x78] sm:$0xff]
    %v210 = vld [vmem:[#allocation8 + $0x80] sm:$0xf]
    %v211 = vld [vmem:[#allocation8 + $0x84] sm:$0xff]
    %v212 = vld [vmem:[#allocation8 + $0x8c] sm:$0xf]
    %v213 = vld [vmem:[#allocation8 + $0x90] sm:$0xff]
    %v214 = vld [vmem:[#allocation8 + $0x98] sm:$0xf]
    %v215 = vld [vmem:[#allocation8 + $0x9c] sm:$0xff]
    %v216 = vld [vmem:[#allocation8 + $0xa4] sm:$0xf]
    %v217 = vld [vmem:[#allocation8 + $0xa8] sm:$0xff]
    %v218 = vld [vmem:[#allocation8 + $0xb0] sm:$0xf]
    %v219 = vld [vmem:[#allocation8 + $0xb4] sm:$0xff]
    %v220 = vld [vmem:[#allocation8 + $0xbc] sm:$0xf]
    %v221 = vld [vmem:[%s4] sm:$0x7]
    %v223 = vperm.slane %v221, 0
    %v224 = vperm.slane %v221, 1
    %v225 = vperm.slane %v221, 2
    %v261 = vunpack.c.l.b16 %v189
    %v262 = vunpack.c.h.b16 %v189
    %v263 = vunpack.c.l.b16 %v190
    %v264 = vunpack.c.l.b16 %v191
    %v265 = vunpack.c.h.b16 %v191
    %v266 = vunpack.c.l.b16 %v192
    %v267 = vunpack.c.l.b16 %v193
    %v268 = vunpack.c.h.b16 %v193
    %v269 = vunpack.c.l.b16 %v194
    %v270 = vunpack.c.l.b16 %v195
    %v271 = vunpack.c.h.b16 %v195
    %v272 = vunpack.c.l.b16 %v196
    %v273 = vunpack.c.l.b16 %v197
    %v274 = vunpack.c.h.b16 %v197
    %v275 = vunpack.c.l.b16 %v198
    %v276 = vunpack.c.l.b16 %v199
    %v277 = vunpack.c.h.b16 %v199
    %v278 = vunpack.c.l.b16 %v200
    %v279 = vunpack.c.l.b16 %v201
    %v280 = vunpack.c.h.b16 %v201
    %v281 = vunpack.c.l.b16 %v202
    %v282 = vunpack.c.l.b16 %v203
    %v283 = vunpack.c.h.b16 %v203
    %v284 = vunpack.c.l.b16 %v204
    %v285 = vunpack.c.l.b16 %v205
    %v286 = vunpack.c.h.b16 %v205
    %v287 = vunpack.c.l.b16 %v206
    %v288 = vunpack.c.l.b16 %v207
    %v289 = vunpack.c.h.b16 %v207
    %v290 = vunpack.c.l.b16 %v208
    %v291 = vunpack.c.l.b16 %v209
    %v292 = vunpack.c.h.b16 %v209
    %v293 = vunpack.c.l.b16 %v210
    %v294 = vunpack.c.l.b16 %v211
    %v295 = vunpack.c.h.b16 %v211
    %v296 = vunpack.c.l.b16 %v212
    %v297 = vunpack.c.l.b16 %v213
    %v298 = vunpack.c.h.b16 %v213
    %v299 = vunpack.c.l.b16 %v214
    %v300 = vunpack.c.l.b16 %v215
    %v301 = vunpack.c.h.b16 %v215
    %v302 = vunpack.c.l.b16 %v216
    %v303 = vunpack.c.l.b16 %v217
    %v304 = vunpack.c.h.b16 %v217
    %v305 = vunpack.c.l.b16 %v218
    %v306 = vunpack.c.l.b16 %v219
    %v307 = vunpack.c.h.b16 %v219
    %v308 = vunpack.c.l.b16 %v220
    %v309 = vpack.c.b16 %v264, %v261
    %v310 = vpack.c.b16 %v265, %v262
    %v311 = vpack.c.b16 %v266, %v263
    %v312 = vpack.c.b16 %v270, %v267
    %v313 = vpack.c.b16 %v271, %v268
    %v314 = vpack.c.b16 %v272, %v269
    %v315 = vpack.c.b16 %v276, %v273
    %v316 = vpack.c.b16 %v277, %v274
    %v317 = vpack.c.b16 %v278, %v275
    %v318 = vpack.c.b16 %v282, %v279
    %v319 = vpack.c.b16 %v283, %v280
    %v320 = vpack.c.b16 %v284, %v281
    %v321 = vpack.c.b16 %v288, %v285
    %v322 = vpack.c.b16 %v289, %v286
    %v323 = vpack.c.b16 %v290, %v287
    %v324 = vpack.c.b16 %v294, %v291
    %v325 = vpack.c.b16 %v295, %v292
    %v326 = vpack.c.b16 %v296, %v293
    %v327 = vpack.c.b16 %v300, %v297
    %v328 = vpack.c.b16 %v301, %v298
    %v329 = vpack.c.b16 %v302, %v299
    %v330 = vpack.c.b16 %v306, %v303
    %v331 = vpack.c.b16 %v307, %v304
    %v332 = vpack.c.b16 %v308, %v305
    %357 = vmatpush.bf16.msra.mxu0 %v330
    %358 = vmatpush.bf16.msra.mxu0 %v327
    %359 = vmatpush.bf16.msra.mxu0 %v324
    %360 = vmatpush.bf16.msra.mxu0 %v321
    %361 = vmatpush.bf16.msra.mxu0 %v318
    %362 = vmatpush.bf16.msra.mxu0 %v315
    %363 = vmatpush.bf16.msra.mxu0 %v312
    %364 = vmatpush.bf16.msra.mxu0 %v309
    %365 = vmatmul.bf16.gmra.mxu0 %v187
    %v366 = vpop.f32.mrf.mxu0
    %v367 = vadd.f32 %v223, %v366
    %v368 = vpop.f32.mrf.mxu0
    %v369 = vadd.f32 %v223, %v368
    %370 = vmatmul.bf16.gmra.mxu0 %v188
    %v371 = vpop.f32.mrf.mxu0
    %v372 = vadd.f32 %v223, %v371
    %v373 = vpop.f32.mrf.mxu0
    %v374 = vadd.f32 %v223, %v373
    %375 = vdwg.mxu0
    %376 = vmatpush.bf16.msra.mxu0 %v331
    %377 = vmatpush.bf16.msra.mxu0 %v328
    %378 = vmatpush.bf16.msra.mxu0 %v325
    %379 = vmatpush.bf16.msra.mxu0 %v322
    %380 = vmatpush.bf16.msra.mxu0 %v319
    %381 = vmatpush.bf16.msra.mxu0 %v316
    %382 = vmatpush.bf16.msra.mxu0 %v313
    %383 = vmatpush.bf16.msra.mxu0 %v310
    %384 = vmatmul.bf16.gmra.mxu0 %v187
    %v385 = vpop.f32.mrf.mxu0
    %v386 = vadd.f32 %v224, %v385
    %v387 = vpop.f32.mrf.mxu0
    %v388 = vadd.f32 %v224, %v387
    %389 = vmatmul.bf16.gmra.mxu0 %v188
    %v390 = vpop.f32.mrf.mxu0
    %v391 = vadd.f32 %v224, %v390
    %v392 = vpop.f32.mrf.mxu0
    %v393 = vadd.f32 %v224, %v392
    %394 = vdwg.mxu0
    %395 = vmatpush.bf16.msra.mxu0 %v332
    %396 = vmatpush.bf16.msra.mxu0 %v329
    %397 = vmatpush.bf16.msra.mxu0 %v326
    %398 = vmatpush.bf16.msra.mxu0 %v323
    %399 = vmatpush.bf16.msra.mxu0 %v320
    %400 = vmatpush.bf16.msra.mxu0 %v317
    %401 = vmatpush.bf16.msra.mxu0 %v314
    %402 = vmatpush.bf16.msra.mxu0 %v311
    %403 = vmatmul.bf16.gmra.mxu0 %v187
    %v404 = vpop.f32.mrf.mxu0
    %v405 = vadd.f32 %v225, %v404
    %v406 = vpop.f32.mrf.mxu0
    %v407 = vadd.f32 %v225, %v406
    %408 = vmatmul.bf16.gmra.mxu0 %v188
    %v409 = vpop.f32.mrf.mxu0
    %v410 = vadd.f32 %v225, %v409
    %v411 = vpop.f32.mrf.mxu0
    %v412 = vadd.f32 %v225, %v411
    %413 = vdwg.mxu0
    %414 = vst [vmem:[#allocation10] sm:$0xff] %v367
    %415 = vst [vmem:[#allocation10 + $0x8] sm:$0xff] %v386
    %416 = vst [vmem:[#allocation10 + $0x10] sm:$0xff] %v405
    %417 = vst [vmem:[#allocation10 + $0x18] sm:$0xff] %v369
    %418 = vst [vmem:[#allocation10 + $0x20] sm:$0xff] %v388
    %419 = vst [vmem:[#allocation10 + $0x28] sm:$0xff] %v407
    %420 = vst [vmem:[#allocation10 + $0x30] sm:$0xff] %v372
    %421 = vst [vmem:[#allocation10 + $0x38] sm:$0xff] %v391
    %422 = vst [vmem:[#allocation10 + $0x40] sm:$0xff] %v410
    %423 = vst [vmem:[#allocation10 + $0x48] sm:$0xff] %v374
    %424 = vst [vmem:[#allocation10 + $0x50] sm:$0xff] %v393
    %425 = vst [vmem:[#allocation10 + $0x58] sm:$0xff] %v412
    // Predicated region
    $region38: #{tpu_custom_call.1} parent=1 // pred_check
      _
    $region39: #{tpu_custom_call.1} parent=1 // pred_check_branch
      %427 = sbr.rel (0) target = $region41
    $region40: #{tpu_custom_call.1} parent=1 // pred_region
      %429 = vsyncadd [#allocation4], 0
      %s430 = sshll.u32 [#allocation10], 4
      %s431 = int_to_ptr.vmem [resolvable:$true] %s430
      %s432 = sshll.u32 %s5, 4
      %s433 = int_to_ptr.hbm [resolvable:$true] %s432
      %438 = dma.vmem_to_hbm [thread:$0]  %s431, 1536, %s433, [#allocation4], 384, 384, 24
    $region41: #{tpu_custom_call.1} parent=1 // pred_fallthru
      _
    // Predicated region
    $region42: #{tpu_custom_call.1} parent=1 // pred_check
      _
    $region43: #{tpu_custom_call.1} parent=1 // pred_check_branch
      %440 = sbr.rel (0) target = $region45
    $region44: #{tpu_custom_call.1} parent=1 // pred_region
      %442 = dma.done [#allocation4], 1536
    $region45: #{tpu_custom_call.1} parent=1 // pred_fallthru
      _
    %443 = vsyncpa [#allocation3], 1
    %444 = vsyncpa [#allocation6], 1
    %445 = vsyncpa [#allocation9], 1
    %446 = vsyncpa [#allocation4], 1

</llo_original>
